<compile_context>
chip_gen: v5e
topology: v5e:2x2
jax: 0.10.0
libtpu: 0.0.40
codegen_flags: <defaults>
</compile_context>

<pallas_src>
import jax
import jax.numpy as jnp
from jax.experimental import pallas as pl
from jax.experimental.pallas import tpu as pltpu


def _pick_batch_tile(batch, bytes_per_image, target_bytes=4 << 20):
    """Largest divisor Bt of `batch` such that the (Bt, C, HW) block stays under the
    target AND (when batch >= 2) at least 2 grid steps remain, so v7x can shard the
    batch axis across its two TensorCores."""
    bt = 1
    for cand in range(1, batch + 1):
        if batch % cand:
            continue
        if cand * bytes_per_image > target_bytes:
            continue
        if batch >= 2 and (batch // cand) < 2:
            continue
        bt = cand
    return bt


# =====================================  kernel  ======================================

def agca_forward(x, params):
    """AGCA forward.  x: (B, C, H, W) f32.

    params = (w1, a2, w2, w3, w4):
      w1: (Ch, C)   conv1 weight (1x1 Conv2d, no bias), Ch = C // ratio
      a2: (Ch, Ch)  learnable A2
      w2: ()        conv2 weight (1x1 Conv1d with 1 in/out channel -> scalar)
      w3: ()        conv3 weight (scalar)
      w4: (C, Ch)   conv4 weight (1x1 Conv2d, no bias)
    """
    w1, a2, w2, w3, w4 = params
    B, C, H, W = x.shape
    Ch = w1.shape[0]
    HW = H * W
    inv_hw = 1.0 / float(HW)

    # (B, C, H, W) -> (B, C, HW): contiguous trailing-dim merge, free (no HBM pass).
    x3 = x.reshape(B, C, HW)
    # Tiny weights: transpose once in the wrapper so the kernel does plain NN dots.
    w1t = jnp.asarray(w1, jnp.float32).T             # (C, Ch)
    w4t = jnp.asarray(w4, jnp.float32).T             # (Ch, C)
    a2f = jnp.asarray(a2, jnp.float32)               # (Ch, Ch)
    scal = jnp.stack([w2, w3]).astype(jnp.float32)   # (2,) conv2/conv3 scalars -> SMEM

    bytes_per_image = C * HW * 4
    Bt = _pick_batch_tile(B, bytes_per_image)
    grid = (B // Bt,)
    block_bytes = Bt * bytes_per_image
    weight_bytes = 4 * (w1.size + a2.size + w4.size)

    # Double-buffered input + output blocks dominate VMEM; generous headroom for
    # Mosaic-internal scratch / tile padding.  Clamped to v7x's 64 MiB physical VMEM.
    vmem_needed = 4 * block_bytes + 4 * weight_bytes + (4 << 20)
    vmem_limit = int(min(max(vmem_needed, 32 << 20), 64 << 20))
    # TODO(synk): feature maps where 4*Bt*C*HW*4B exceeds ~64 MiB (v7x VMEM) need a
    # two-phase HW-tiled design (pass 1 accumulates the pooled sum over HW tiles,
    # pass 2 applies x*att per tile); not required at these shapes.

    def kernel(scal_ref, x_ref, w1t_ref, a2_ref, w4t_ref, o_ref):
        # AdaptiveAvgPool2d(1): mean over the flattened spatial (lane) dim.
        pooled = jnp.sum(x_ref[...], axis=2) * inv_hw                         # (Bt, C)
        # conv1 (1x1 Conv2d, no bias)
        y = jnp.dot(pooled, w1t_ref[...],
                    preferred_element_type=jnp.float32)                       # (Bt, Ch)
        w2_s = scal_ref[0]                                                    # conv2
        w3_s = scal_ref[1]                                                    # conv3
        # softmax over the hidden-channel dim (torch softmax(2) on a (B,1,Ch) tensor)
        s = w2_s * y
        s = s - jnp.max(s, axis=1, keepdims=True)
        e = jnp.exp(s)
        a1 = e / jnp.sum(e, axis=1, keepdims=True)
        # torch: y_row @ (A0*A1 + A2)  ==  y*a1 + y @ A2    (A0 = eye folded away)
        z = y * a1 + jnp.dot(y, a2_ref[...], preferred_element_type=jnp.float32)
        z = jnp.maximum(w3_s * z, 0.0)                                        # conv3+ReLU
        att = jax.nn.sigmoid(jnp.dot(z, w4t_ref[...],
                                     preferred_element_type=jnp.float32))     # (Bt, C)
        # Channel re-weighting.  x_ref is re-indexed here (second independent vld
        # stream) rather than reusing a value bound before the small serial chain.
        o_ref[...] = x_ref[...] * att[:, :, None]

    cost = pl.CostEstimate(
        flops=int(B * (2 * C * HW + 2 * C * Ch + 2 * Ch * Ch + 2 * Ch * C + 8 * Ch)),
        transcendentals=int(B * (Ch + C)),                       # exp + sigmoid
        bytes_accessed=int(2 * B * C * HW * 4 + weight_bytes + scal.size * 4),
    )

    out = pl.pallas_call(
        kernel,
        out_shape=jax.ShapeDtypeStruct((B, C, HW), jnp.float32),
        grid=grid,
        in_specs=[
            pl.BlockSpec(memory_space=pltpu.MemorySpace.SMEM),     # conv2/conv3 scalars
            pl.BlockSpec((Bt, C, HW), lambda b: (b, 0, 0)),        # x: Bt images / step
            pl.BlockSpec((C, Ch), lambda b: (0, 0)),               # conv1 weight^T
            pl.BlockSpec((Ch, Ch), lambda b: (0, 0)),              # A2
            pl.BlockSpec((Ch, C), lambda b: (0, 0)),               # conv4 weight^T
        ],
        out_specs=pl.BlockSpec((Bt, C, HW), lambda b: (b, 0, 0)),
        compiler_params=pltpu.CompilerParams(
            dimension_semantics=("parallel",),     # v7x: shard batch grid on both TCs
            vmem_limit_bytes=vmem_limit,
        ),
        cost_estimate=cost,
    )(scal, x3, w1t, a2f, w4t)

    return out.reshape(B, C, H, W)


# =============================  pure-JAX reference  ==================================

def agca_reference(x, params):
    w1, a2, w2, w3, w4 = params
    pooled = jnp.mean(x, axis=(2, 3))                    # (B, C)   avg_pool
    y = pooled @ w1.T                                    # (B, Ch)  conv1
    a1 = jax.nn.softmax(w2 * y, axis=-1)                 # conv2 + softmax(dim=2)
    z = y * a1 + y @ a2                                  # y @ (A0*A1 + A2)
    z = jnp.maximum(w3 * z, 0.0)                         # conv3 + ReLU
    att = jax.nn.sigmoid(z @ w4.T)                       # conv4 + sigmoid -> (B, C)
    return x * att[:, :, None, None]


# =======================================  main  ======================================

if __name__ == "__main__":
    B, C_IN, RATIO, H, W = 2, 64, 4, 16, 16
    CH = C_IN // RATIO

    key = jax.random.PRNGKey(0)
    kx, k1, k2, k3, k4, k5 = jax.random.split(key, 6)

    x = jax.random.normal(kx, (B, C_IN, H, W), jnp.float32)
    w1 = 0.1 * jax.random.normal(k1, (CH, C_IN), jnp.float32)    # conv1 weight (no bias)
    a2 = jnp.full((CH, CH), 1e-6, jnp.float32)                   # init.constant_(A2, 1e-6)
    w2 = 0.5 + 0.1 * jax.random.normal(k2, (), jnp.float32)      # conv2 (1x1 Conv1d) scalar
    w3 = 0.5 + 0.1 * jax.random.normal(k3, (), jnp.float32)      # conv3 (1x1 Conv1d) scalar
    w4 = 0.1 * jax.random.normal(k4, (C_IN, CH), jnp.float32)    # conv4 weight (no bias)
    params = (w1, a2, w2, w3, w4)

    out = jax.block_until_ready(agca_forward(x, params))
    ref = jax.block_until_ready(agca_reference(x, params))
    assert out.shape == x.shape
    assert jnp.allclose(out, ref, rtol=1e-2, atol=1e-2)

    # The constant A2 is symmetric and would mask an orientation bug, so also validate
    # with a non-symmetric A2.
    params_t = (w1, 1e-2 * jax.random.normal(k5, (CH, CH), jnp.float32), w2, w3, w4)
    out_t = jax.block_until_ready(agca_forward(x, params_t))
    ref_t = agca_reference(x, params_t)
    assert jnp.allclose(out_t, ref_t, rtol=1e-2, atol=1e-2)

    print("KERNEL_OK")
</pallas_src>

<mosaic_0001>
module attributes {stable_mosaic.version = 11 : i64} {
  func.func @kernel(%arg0: i32, %arg1: memref<2xf32, #tpu.memory_space<smem>>, %arg2: memref<1x64x256xf32, #tpu.memory_space<vmem>>, %arg3: memref<64x16xf32, #tpu.memory_space<vmem>>, %arg4: memref<16x16xf32, #tpu.memory_space<vmem>>, %arg5: memref<16x64xf32, #tpu.memory_space<vmem>>, %arg6: memref<1x64x256xf32, #tpu.memory_space<vmem>>) attributes {dimension_semantics = [#tpu.dimension_semantics<parallel>], iteration_bounds = array<i64: 2>, scalar_prefetch = 0 : i64, scratch_operands = 0 : i64, tpu.core_type = #tpu.core_type<tc>, window_params = [{transform_indices = @transform_0, window_bounds = array<i64: 2>}, {transform_indices = @transform_1, window_bounds = array<i64: 1, 64, 256>}, {pipeline_mode = #tpu.pipeline_mode<synchronous>, transform_indices = @transform_2, window_bounds = array<i64: 64, 16>}, {pipeline_mode = #tpu.pipeline_mode<synchronous>, transform_indices = @transform_3, window_bounds = array<i64: 16, 16>}, {pipeline_mode = #tpu.pipeline_mode<synchronous>, transform_indices = @transform_4, window_bounds = array<i64: 16, 64>}, {transform_indices = @transform_5, window_bounds = array<i64: 1, 64, 256>}]} {
    %c0 = arith.constant 0 : index
    %c0_0 = arith.constant 0 : index
    %c0_1 = arith.constant 0 : index
    %0 = vector.load %arg2[%c0, %c0_0, %c0_1] : memref<1x64x256xf32, #tpu.memory_space<vmem>>, vector<1x64x256xf32>
    %cst = arith.constant dense<0.000000e+00> : vector<1x64xf32>
    %1 = vector.multi_reduction <add>, %0, %cst [2] : vector<1x64x256xf32> to vector<1x64xf32>
    %cst_2 = arith.constant 3.906250e-03 : f32
    %2 = vector.broadcast %cst_2 : f32 to vector<1x64xf32>
    %3 = arith.mulf %1, %2 : vector<1x64xf32>
    %c0_3 = arith.constant 0 : index
    %c0_4 = arith.constant 0 : index
    %4 = vector.load %arg3[%c0_3, %c0_4] : memref<64x16xf32, #tpu.memory_space<vmem>>, vector<64x16xf32>
    %cst_5 = arith.constant dense<0.000000e+00> : vector<1x16xf32>
    %5 = tpu.matmul %3, %4, %cst_5 {dimension_numbers = #tpu.dot_dimension_numbers<[1], [0], [0], [1], [0, 0, 1, 1], [], []>} : vector<1x64xf32>, vector<64x16xf32>, vector<1x16xf32> -> vector<1x16xf32>
    %c0_6 = arith.constant 0 : index
    %6 = memref.load %arg1[%c0_6] : memref<2xf32, #tpu.memory_space<smem>>
    %c1 = arith.constant 1 : index
    %7 = memref.load %arg1[%c1] : memref<2xf32, #tpu.memory_space<smem>>
    %8 = vector.broadcast %6 : f32 to vector<1x16xf32>
    %9 = arith.mulf %8, %5 : vector<1x16xf32>
    %cst_7 = arith.constant dense<0xFF800000> : vector<1xf32>
    %10 = vector.multi_reduction <maximumf>, %9, %cst_7 [1] : vector<1x16xf32> to vector<1xf32>
    %11 = vector.shape_cast %10 : vector<1xf32> to vector<1x1xf32>
    %12 = vector.broadcast %11 : vector<1x1xf32> to vector<1x16xf32>
    %13 = arith.subf %9, %12 : vector<1x16xf32>
    %14 = math.exp %13 : vector<1x16xf32>
    %cst_8 = arith.constant dense<0.000000e+00> : vector<1xf32>
    %15 = vector.multi_reduction <add>, %14, %cst_8 [1] : vector<1x16xf32> to vector<1xf32>
    %16 = vector.shape_cast %15 : vector<1xf32> to vector<1x1xf32>
    %17 = vector.broadcast %16 : vector<1x1xf32> to vector<1x16xf32>
    %18 = arith.divf %14, %17 : vector<1x16xf32>
    %19 = arith.mulf %5, %18 : vector<1x16xf32>
    %c0_9 = arith.constant 0 : index
    %c0_10 = arith.constant 0 : index
    %20 = vector.load %arg4[%c0_9, %c0_10] : memref<16x16xf32, #tpu.memory_space<vmem>>, vector<16x16xf32>
    %cst_11 = arith.constant dense<0.000000e+00> : vector<1x16xf32>
    %21 = tpu.matmul %5, %20, %cst_11 {dimension_numbers = #tpu.dot_dimension_numbers<[1], [0], [0], [1], [0, 0, 1, 1], [], []>} : vector<1x16xf32>, vector<16x16xf32>, vector<1x16xf32> -> vector<1x16xf32>
    %22 = arith.addf %19, %21 : vector<1x16xf32>
    %23 = vector.broadcast %7 : f32 to vector<1x16xf32>
    %24 = arith.mulf %23, %22 : vector<1x16xf32>
    %cst_12 = arith.constant 0.000000e+00 : f32
    %25 = vector.broadcast %cst_12 : f32 to vector<1x16xf32>
    %26 = arith.maximumf %24, %25 : vector<1x16xf32>
    %c0_13 = arith.constant 0 : index
    %c0_14 = arith.constant 0 : index
    %27 = vector.load %arg5[%c0_13, %c0_14] : memref<16x64xf32, #tpu.memory_space<vmem>>, vector<16x64xf32>
    %cst_15 = arith.constant dense<0.000000e+00> : vector<1x64xf32>
    %28 = tpu.matmul %26, %27, %cst_15 {dimension_numbers = #tpu.dot_dimension_numbers<[1], [0], [0], [1], [0, 0, 1, 1], [], []>} : vector<1x16xf32>, vector<16x64xf32>, vector<1x64xf32> -> vector<1x64xf32>
    %29 = arith.negf %28 : vector<1x64xf32>
    %30 = math.exp %29 : vector<1x64xf32>
    %cst_16 = arith.constant 1.000000e+00 : f32
    %31 = vector.broadcast %cst_16 : f32 to vector<1x64xf32>
    %32 = arith.addf %31, %30 : vector<1x64xf32>
    %33 = arith.divf %31, %32 : vector<1x64xf32>
    %c0_17 = arith.constant 0 : index
    %c0_18 = arith.constant 0 : index
    %c0_19 = arith.constant 0 : index
    %34 = vector.load %arg2[%c0_17, %c0_18, %c0_19] : memref<1x64x256xf32, #tpu.memory_space<vmem>>, vector<1x64x256xf32>
    %35 = vector.shape_cast %33 : vector<1x64xf32> to vector<1x64x1xf32>
    %36 = vector.broadcast %35 : vector<1x64x1xf32> to vector<1x64x256xf32>
    %37 = arith.mulf %34, %36 : vector<1x64x256xf32>
    %c0_20 = arith.constant 0 : index
    %c0_21 = arith.constant 0 : index
    %c0_22 = arith.constant 0 : index
    %38 = vector.load %arg6[%c0_20, %c0_21, %c0_22] : memref<1x64x256xf32, #tpu.memory_space<vmem>>, vector<1x64x256xf32>
    tpu.vector_store %arg6[%c0_20, %c0_21, %c0_22], %37 {strides = array<i32>} : memref<1x64x256xf32, #tpu.memory_space<vmem>>, vector<1x64x256xf32>,
    return
  }
  func.func @transform_0(%arg0: i32) -> i32 {
    %c0_i32 = arith.constant 0 : i32
    %c0_i32_0 = arith.constant 0 : i32
    return %c0_i32 : i32
  }
  func.func @transform_1(%arg0: i32) -> (i32, i32, i32) {
    %c0_i32 = arith.constant 0 : i32
    %c0_i32_0 = arith.constant 0 : i32
    %c0_i32_1 = arith.constant 0 : i32
    return %arg0, %c0_i32, %c0_i32_0 : i32, i32, i32
  }
  func.func @transform_2(%arg0: i32) -> (i32, i32) {
    %c0_i32 = arith.constant 0 : i32
    %c0_i32_0 = arith.constant 0 : i32
    %c0_i32_1 = arith.constant 0 : i32
    return %c0_i32, %c0_i32_0 : i32, i32
  }
  func.func @transform_3(%arg0: i32) -> (i32, i32) {
    %c0_i32 = arith.constant 0 : i32
    %c0_i32_0 = arith.constant 0 : i32
    %c0_i32_1 = arith.constant 0 : i32
    return %c0_i32, %c0_i32_0 : i32, i32
  }
  func.func @transform_4(%arg0: i32) -> (i32, i32) {
    %c0_i32 = arith.constant 0 : i32
    %c0_i32_0 = arith.constant 0 : i32
    %c0_i32_1 = arith.constant 0 : i32
    return %c0_i32, %c0_i32_0 : i32, i32
  }
  func.func @transform_5(%arg0: i32) -> (i32, i32, i32) {
    %c0_i32 = arith.constant 0 : i32
    %c0_i32_0 = arith.constant 0 : i32
    %c0_i32_1 = arith.constant 0 : i32
    return %arg0, %c0_i32, %c0_i32_0 : i32, i32, i32
  }
}

</mosaic_0001>

<llo_original>
// kernel: tpu_custom_call.1
$region0: #{tpu_custom_call.1}
  #allocation0 [shape = 'u32[]', space=smem, size = 0x4, offset = 0x4, fixed_abs, tag = 'smem constant byte address 0x4 - core index']
  #allocation1 [shape = 'u32[72,128]{1,0:T(1,128)}', space=vmem, size = 0x9000, scoped, tag = 'internal scratch']
  %s0 = inlined_call_operand.vmem [shape: f32[2], index: 0, kind: input, shape index: {}]
  %s1 = inlined_call_operand.hbm [shape: f32[2,64,256], index: 1, kind: input, shape index: {}]
  %s2 = inlined_call_operand.vmem [shape: f32[64,16], index: 2, kind: input, shape index: {}]
  %s3 = inlined_call_operand.vmem [shape: f32[16,16], index: 3, kind: input, shape index: {}]
  %s4 = inlined_call_operand.vmem [shape: f32[16,64], index: 4, kind: input, shape index: {}]
  %s5 = inlined_call_operand.hbm [shape: f32[2,64,256], index: 5, kind: output, shape index: {}]
  %s6 = sld [smem:[#allocation0]]
  $region61: #{tpu_custom_call.1} parent=0
    _
  %s8 = ssub.s32 1, %s6
  %s9 = scalar_select 0, %s8, %s6
  $region1: #{tpu_custom_call.1} parent=0
    #allocation2 [shape = 'u8[512]{0}', space=smem, size = 0x200, scoped, tag = 'input window, operand 0, single buffered']
    #allocation3 [shape = 's32[2]{0}', space=sflag, size = 0x8, scoped, tag = 'scoped memory for tpu_custom_call.1']
    #allocation4 [shape = 's32[2]{0}', space=sflag, size = 0x8, scoped, tag = 'scoped memory for tpu_custom_call.1']
    #allocation5 [shape = 's32[2]{0}', space=sflag, size = 0x8, scoped, tag = 'scoped memory for tpu_custom_call.1']
    #allocation6 [shape = 'u8[131072]{0}', space=vmem, size = 0x20000, scoped, tag = 'input window, operand 1']
    #allocation7 [shape = 'u8[131072]{0}', space=vmem, size = 0x20000, scoped, tag = 'output window, operand 0']
    %10 = vsyncpa [#allocation5], 0
    %11 = vsyncpa [#allocation3], 0
    %s12 = scalar_lea.sflag [#allocation3], 1
    %13 = vsyncpa %s12, 0
    %14 = vsyncpa [#allocation4], 0
    %s15 = scalar_lea.sflag [#allocation4], 1
    %16 = vsyncpa %s15, 0
    loop: start=0, step=1, limit=4
    $region2: #{tpu_custom_call.1} parent=1 // loop_pre_header
      _
    $region3: #{tpu_custom_call.1} parent=1 // loop_header
      %s18 = sphi 0, %s22
      %p19 = scmp.ge.s32.totalorder %s18, 4
      %s26 = sphi 0, %s26
      %s28 = sphi 0, %s26
      %s29 = sphi 0, %s28
      %s43 = sphi 0, %s29
      %s49 = sphi 0, %s51
      %s52 = sphi 0, %s49
      %s53 = sphi 0, %s52
      %s69 = sphi 0, %s53
      %s73 = sphi 0, %s73
      %s75 = sphi 0, %s73
      %s76 = sphi 0, %s75
      %s90 = sphi 0, %s76
      %s94 = sphi 0, %s94
      %s96 = sphi 0, %s94
      %s97 = sphi 0, %s96
      %s111 = sphi 0, %s97
      %s115 = sphi 0, %s115
      %s117 = sphi 0, %s115
      %s118 = sphi 0, %s117
      %s132 = sphi 0, %s118
      %s138 = sphi 0, %s140
      %s141 = sphi 0, %s138
      %s142 = sphi 0, %s141
      %s158 = sphi 0, %s142
    $region4: #{tpu_custom_call.1} parent=1 // loop_header_branch
      %21 = sbr.rel (%p19) target = $region8
    $region5: #{tpu_custom_call.1} parent=1 // loop_body
      %s23 = ssub.s32 %s18, 1
      %s24 = ssub.s32 %s18, 2
      %s25 = sadd.s32 %s18, 1
      %s27 = sadd.s32 %s26, 1
      %p30 = scmp.eq.s32.totalorder %s18, 1
      %p31 = scmp.ne.s32.totalorder %s26, %s28
      %p32 = scmp.eq.s32.totalorder %s18, 0
      %p33 = por %p31, %p32
      %p34 = scmp.ne.s32.totalorder %s26, %s28
      %p35 = scmp.eq.s32.totalorder %s23, 1
      %p36 = por %p34, %p35
      %p37 = scmp.ne.s32.totalorder %s28, %s29
      %p38 = scmp.eq.s32.totalorder %s23, 0
      %p39 = por %p37, %p38
      %p40 = scmp.ne.s32.totalorder %s28, %s29
      %p41 = scmp.eq.s32.totalorder %s24, 1
      %p42 = por %p40, %p41
      %p44 = scmp.ne.s32.totalorder %s29, %s43
      %p45 = scmp.eq.s32.totalorder %s24, 0
      %p46 = por %p44, %p45
      %s47 = ssub.s32 %s18, %s25
      %p48 = scmp.eq.s32.totalorder %s47, 0
      %s50 = sadd.s32 %s49, 1
      %s51 = scalar_select %p48, %s49, %s50
      %p54 = pneg %p48
      %p55 = scmp.eq.s32.totalorder %s18, 1
      %p56 = por %p54, %p55
      %p57 = scmp.ne.s32.totalorder %s49, %s52
      %p58 = scmp.eq.s32.totalorder %s18, 0
      %p59 = por %p57, %p58
      %p60 = scmp.ne.s32.totalorder %s49, %s52
      %p61 = scmp.eq.s32.totalorder %s23, 1
      %p62 = por %p60, %p61
      %p63 = scmp.ne.s32.totalorder %s52, %s53
      %p64 = scmp.eq.s32.totalorder %s23, 0
      %p65 = por %p63, %p64
      %p66 = scmp.ne.s32.totalorder %s52, %s53
      %p67 = scmp.eq.s32.totalorder %s24, 1
      %p68 = por %p66, %p67
      %p70 = scmp.ne.s32.totalorder %s53, %s69
      %p71 = scmp.eq.s32.totalorder %s24, 0
      %p72 = por %p70, %p71
      %s74 = sadd.s32 %s73, 1
      %p77 = scmp.eq.s32.totalorder %s18, 1
      %p78 = scmp.ne.s32.totalorder %s73, %s75
      %p79 = scmp.eq.s32.totalorder %s18, 0
      %p80 = por %p78, %p79
      %p81 = scmp.ne.s32.totalorder %s73, %s75
      %p82 = scmp.eq.s32.totalorder %s23, 1
      %p83 = por %p81, %p82
      %p84 = scmp.ne.s32.totalorder %s75, %s76
      %p85 = scmp.eq.s32.totalorder %s23, 0
      %p86 = por %p84, %p85
      %p87 = scmp.ne.s32.totalorder %s75, %s76
      %p88 = scmp.eq.s32.totalorder %s24, 1
      %p89 = por %p87, %p88
      %p91 = scmp.ne.s32.totalorder %s76, %s90
      %p92 = scmp.eq.s32.totalorder %s24, 0
      %p93 = por %p91, %p92
      %s95 = sadd.s32 %s94, 1
      %p98 = scmp.eq.s32.totalorder %s18, 1
      %p99 = scmp.ne.s32.totalorder %s94, %s96
      %p100 = scmp.eq.s32.totalorder %s18, 0
      %p101 = por %p99, %p100
      %p102 = scmp.ne.s32.totalorder %s94, %s96
      %p103 = scmp.eq.s32.totalorder %s23, 1
      %p104 = por %p102, %p103
      %p105 = scmp.ne.s32.totalorder %s96, %s97
      %p106 = scmp.eq.s32.totalorder %s23, 0
      %p107 = por %p105, %p106
      %p108 = scmp.ne.s32.totalorder %s96, %s97
      %p109 = scmp.eq.s32.totalorder %s24, 1
      %p110 = por %p108, %p109
      %p112 = scmp.ne.s32.totalorder %s97, %s111
      %p113 = scmp.eq.s32.totalorder %s24, 0
      %p114 = por %p112, %p113
      %s116 = sadd.s32 %s115, 1
      %p119 = scmp.eq.s32.totalorder %s18, 1
      %p120 = scmp.ne.s32.totalorder %s115, %s117
      %p121 = scmp.eq.s32.totalorder %s18, 0
      %p122 = por %p120, %p121
      %p123 = scmp.ne.s32.totalorder %s115, %s117
      %p124 = scmp.eq.s32.totalorder %s23, 1
      %p125 = por %p123, %p124
      %p126 = scmp.ne.s32.totalorder %s117, %s118
      %p127 = scmp.eq.s32.totalorder %s23, 0
      %p128 = por %p126, %p127
      %p129 = scmp.ne.s32.totalorder %s117, %s118
      %p130 = scmp.eq.s32.totalorder %s24, 1
      %p131 = por %p129, %p130
      %p133 = scmp.ne.s32.totalorder %s118, %s132
      %p134 = scmp.eq.s32.totalorder %s24, 0
      %p135 = por %p133, %p134
      %s136 = ssub.s32 %s18, %s25
      %p137 = scmp.eq.s32.totalorder %s136, 0
      %s139 = sadd.s32 %s138, 1
      %s140 = scalar_select %p137, %s138, %s139
      %p143 = pneg %p137
      %p144 = scmp.eq.s32.totalorder %s18, 1
      %p145 = por %p143, %p144
      %p146 = scmp.ne.s32.totalorder %s138, %s141
      %p147 = scmp.eq.s32.totalorder %s18, 0
      %p148 = por %p146, %p147
      %p149 = scmp.ne.s32.totalorder %s138, %s141
      %p150 = scmp.eq.s32.totalorder %s23, 1
      %p151 = por %p149, %p150
      %p152 = scmp.ne.s32.totalorder %s141, %s142
      %p153 = scmp.eq.s32.totalorder %s23, 0
      %p154 = por %p152, %p153
      %p155 = scmp.ne.s32.totalorder %s141, %s142
      %p156 = scmp.eq.s32.totalorder %s24, 1
      %p157 = por %p155, %p156
      %p159 = scmp.ne.s32.totalorder %s142, %s158
      %p160 = scmp.eq.s32.totalorder %s24, 0
      %p161 = por %p159, %p160
      %p162 = scmp.le.s32.totalorder 1, %s18
      %p163 = scmp.lt.s32.totalorder %s18, 3
      %p164 = pnand %p162, %p163
      %p165 = pneg %p164
      // Predicated region
      $region9: #{tpu_custom_call.1} parent=5 // pred_check
        _
      $region10: #{tpu_custom_call.1} parent=5 // pred_check_branch
        %167 = sbr.rel (%p164) target = $region12
      $region11: #{tpu_custom_call.1} parent=5 // pred_region
        %s168 = ssub.s32 %s18, 1
        // Predicated region
        $region13: #{tpu_custom_call.1} parent=11 // pred_check
          %p169 = pneg %p39
        $region14: #{tpu_custom_call.1} parent=11 // pred_check_branch
          %171 = sbr.rel (%p169) target = $region16
        $region15: #{tpu_custom_call.1} parent=11 // pred_region
          %173 = vsyncadd [#allocation5], 0
          %s175 = sshll.u32 %s0, 4
          %s176 = int_to_ptr.vmem [resolvable:$true] %s175
          %178 = dma.vmem_to_smem %s176, 16, [#allocation2], [#allocation5]
        $region16: #{tpu_custom_call.1} parent=11 // pred_fallthru
          _
        // Predicated region
        $region17: #{tpu_custom_call.1} parent=11 // pred_check
          %p179 = pneg %p86
        $region18: #{tpu_custom_call.1} parent=11 // pred_check_branch
          %181 = sbr.rel (%p179) target = $region20
        $region19: #{tpu_custom_call.1} parent=11 // pred_region
          _
        $region20: #{tpu_custom_call.1} parent=11 // pred_fallthru
          _
        // Predicated region
        $region21: #{tpu_custom_call.1} parent=11 // pred_check
          %p182 = pneg %p107
        $region22: #{tpu_custom_call.1} parent=11 // pred_check_branch
          %184 = sbr.rel (%p182) target = $region24
        $region23: #{tpu_custom_call.1} parent=11 // pred_region
          _
        $region24: #{tpu_custom_call.1} parent=11 // pred_fallthru
          _
        // Predicated region
        $region25: #{tpu_custom_call.1} parent=11 // pred_check
          %p185 = pneg %p128
        $region26: #{tpu_custom_call.1} parent=11 // pred_check_branch
          %187 = sbr.rel (%p185) target = $region28
        $region27: #{tpu_custom_call.1} parent=11 // pred_region
          _
        $region28: #{tpu_custom_call.1} parent=11 // pred_fallthru
          _
      $region12: #{tpu_custom_call.1} parent=5 // pred_fallthru
        _
      %p188 = scmp.lt.s32.totalorder %s18, 2
      // Predicated region
      $region29: #{tpu_custom_call.1} parent=5 // pred_check
        %p189 = pneg %p188
      $region30: #{tpu_custom_call.1} parent=5 // pred_check_branch
        %191 = sbr.rel (%p189) target = $region32
      $region31: #{tpu_custom_call.1} parent=5 // pred_region
        // Predicated region
        $region33: #{tpu_custom_call.1} parent=31 // pred_check
          %p192 = pneg %p59
        $region34: #{tpu_custom_call.1} parent=31 // pred_check_branch
          %194 = sbr.rel (%p192) target = $region36
        $region35: #{tpu_custom_call.1} parent=31 // pred_region
          %s195 = sand.u32 %s49, 1
          %s196 = scalar_lea.sflag [#allocation3], %s195
          %s197 = sand.u32 %s49, 1
          %s198 = smul.addr %s197, 128
          %s199 = scalar_lea.vmem [#allocation6], %s198
          %201 = vsyncadd %s196, 0
          %s202 = smul.addr %s18, 16
          %s203 = smul.addr %s202, 8
          %s204 = scalar_lea.hbm %s1, %s203
          %s205 = sshll.u32 %s204, 4
          %s206 = int_to_ptr.hbm [resolvable:$true] %s205
          %s207 = sshll.u32 %s199, 4
          %s208 = int_to_ptr.vmem [resolvable:$true] %s207
          %213 = dma.hbm_to_vmem [thread:$0]  %s206, 2048, %s208, %s196, 256, 256, 16
        $region36: #{tpu_custom_call.1} parent=31 // pred_fallthru
          _
      $region32: #{tpu_custom_call.1} parent=5 // pred_fallthru
        _
      %p214 = scmp.le.s32.totalorder 1, %s18
      %p215 = scmp.lt.s32.totalorder %s18, 3
      %p216 = pnand %p214, %p215
      %p217 = pneg %p216
      // Predicated region
      $region37: #{tpu_custom_call.1} parent=5 // pred_check
        _
      $region38: #{tpu_custom_call.1} parent=5 // pred_check_branch
        %219 = sbr.rel (%p216) target = $region40
      $region39: #{tpu_custom_call.1} parent=5 // pred_region
        %s220 = ssub.s32 %s18, 1
        // Predicated region
        $region41: #{tpu_custom_call.1} parent=39 // pred_check
          %p221 = pneg %p39
        $region42: #{tpu_custom_call.1} parent=39 // pred_check_branch
          %223 = sbr.rel (%p221) target = $region44
        $region43: #{tpu_custom_call.1} parent=39 // pred_region
          %225 = dma.done [#allocation5], 16
        $region44: #{tpu_custom_call.1} parent=39 // pred_fallthru
          _
        %s226 = sand.u32 %s52, 1
        %s227 = scalar_lea.sflag [#allocation3], %s226
        %s228 = sand.u32 %s52, 1
        %s229 = smul.addr %s228, 128
        %s230 = scalar_lea.vmem [#allocation6], %s229
        // Predicated region
        $region45: #{tpu_custom_call.1} parent=39 // pred_check
          %p231 = pneg %p65
        $region46: #{tpu_custom_call.1} parent=39 // pred_check_branch
          %233 = sbr.rel (%p231) target = $region48
        $region47: #{tpu_custom_call.1} parent=39 // pred_region
          %235 = dma.done %s227, 2048
        $region48: #{tpu_custom_call.1} parent=39 // pred_fallthru
          _
        %236 = sfence
        %p237 = pneg %p39
        %p238 = pneg %p36
        %s239 = sand.u32 %s52, 1
        %s240 = scalar_lea.sflag [#allocation3], %s239
        %s241 = sand.u32 %s52, 1
        %s242 = smul.addr %s241, 128
        %s243 = scalar_lea.vmem [#allocation6], %s242
        %p244 = pneg %p65
        %p245 = pneg %p62
        %p246 = pneg %p86
        %p247 = pneg %p83
        %p248 = pneg %p107
        %p249 = pneg %p104
        %p250 = pneg %p128
        %p251 = pneg %p125
        %p252 = pneg %p154
        %p253 = pneg %p151
        %s254 = sand.u32 %s141, 1
        %s255 = scalar_lea.sflag [#allocation4], %s254
        %s256 = sand.u32 %s141, 1
        %s257 = smul.addr %s256, 128
        %s258 = scalar_lea.vmem [#allocation7], %s257
        %v259 = vld [vmem:[%s230] sm:$0xff]
        %v260 = vld [vmem:[%s230 + $0x8] sm:$0xff]
        %v261 = vld [vmem:[%s230 + $0x10] sm:$0xff]
        %v262 = vld [vmem:[%s230 + $0x18] sm:$0xff]
        %v263 = vld [vmem:[%s230 + $0x20] sm:$0xff]
        %v264 = vld [vmem:[%s230 + $0x28] sm:$0xff]
        %v265 = vld [vmem:[%s230 + $0x30] sm:$0xff]
        %v266 = vld [vmem:[%s230 + $0x38] sm:$0xff]
        %v267 = vld [vmem:[%s230 + $0x40] sm:$0xff]
        %v268 = vld [vmem:[%s230 + $0x48] sm:$0xff]
        %v269 = vld [vmem:[%s230 + $0x50] sm:$0xff]
        %v270 = vld [vmem:[%s230 + $0x58] sm:$0xff]
        %v271 = vld [vmem:[%s230 + $0x60] sm:$0xff]
        %v272 = vld [vmem:[%s230 + $0x68] sm:$0xff]
        %v273 = vld [vmem:[%s230 + $0x70] sm:$0xff]
        %v274 = vld [vmem:[%s230 + $0x78] sm:$0xff]
        %v275 = vadd.f32 %v259, %v260
        %276 = vadd.xlane.f32.xlu0 %v275
        %v277 = vpop.xlane.xlu0 %276
        %v278 = vadd.f32 %v261, %v262
        %279 = vadd.xlane.f32.xlu0 %v278
        %v280 = vpop.xlane.xlu0 %279
        %v281 = vadd.f32 %v263, %v264
        %282 = vadd.xlane.f32.xlu0 %v281
        %v283 = vpop.xlane.xlu0 %282
        %v284 = vadd.f32 %v265, %v266
        %285 = vadd.xlane.f32.xlu0 %v284
        %v286 = vpop.xlane.xlu0 %285
        %v287 = vadd.f32 %v267, %v268
        %288 = vadd.xlane.f32.xlu0 %v287
        %v289 = vpop.xlane.xlu0 %288
        %v290 = vadd.f32 %v269, %v270
        %291 = vadd.xlane.f32.xlu0 %v290
        %v292 = vpop.xlane.xlu0 %291
        %v293 = vadd.f32 %v271, %v272
        %294 = vadd.xlane.f32.xlu0 %v293
        %v295 = vpop.xlane.xlu0 %294
        %v296 = vadd.f32 %v273, %v274
        %297 = vadd.xlane.f32.xlu0 %v296
        %v298 = vpop.xlane.xlu0 %297
        %v299 = vmul.f32 %v277, 0.00390625
        %v300 = vmul.f32 %v280, 0.00390625
        %v301 = vmul.f32 %v283, 0.00390625
        %v302 = vmul.f32 %v286, 0.00390625
        %v303 = vmul.f32 %v289, 0.00390625
        %v304 = vmul.f32 %v292, 0.00390625
        %v305 = vmul.f32 %v295, 0.00390625
        %v306 = vmul.f32 %v298, 0.00390625
        %v307 = vld [vmem:[%s2] sm:$0xff]
        %v308 = vld [vmem:[%s2 + $0x8] sm:$0xff]
        %v309 = vld [vmem:[%s2 + $0x10] sm:$0xff]
        %v310 = vld [vmem:[%s2 + $0x18] sm:$0xff]
        %v311 = vld [vmem:[%s2 + $0x20] sm:$0xff]
        %v312 = vld [vmem:[%s2 + $0x28] sm:$0xff]
        %v313 = vld [vmem:[%s2 + $0x30] sm:$0xff]
        %v314 = vld [vmem:[%s2 + $0x38] sm:$0xff]
        %v323 = vlaneseq
        %v324 = vand.u32 %v323, 127
        %v325 = vperm.slane %v299, %v324
        %v326 = vadd.s32 %v324, 4294967288
        %v327 = vperm.slane %v300, %v326
        %vm328 = vcmask 130112
        %v329 = vsel %vm328, %v327, %v325
        %v330 = vadd.s32 %v324, 4294967280
        %v331 = vperm.slane %v301, %v330
        %vm332 = vcmask 195712
        %v333 = vsel %vm332, %v331, %v329
        %v334 = vadd.s32 %v324, 4294967272
        %v335 = vperm.slane %v302, %v334
        %vm336 = vcmask 261312
        %v337 = vsel %vm336, %v335, %v333
        %v338 = vadd.s32 %v324, 4294967264
        %v339 = vperm.slane %v303, %v338
        %vm340 = vcmask 326912
        %v341 = vsel %vm340, %v339, %v337
        %v342 = vadd.s32 %v324, 4294967256
        %v343 = vperm.slane %v304, %v342
        %vm344 = vcmask 392512
        %v345 = vsel %vm344, %v343, %v341
        %v346 = vadd.s32 %v324, 4294967248
        %v347 = vperm.slane %v305, %v346
        %vm348 = vcmask 458112
        %v349 = vsel %vm348, %v347, %v345
        %v350 = vadd.s32 %v324, 4294967240
        %v351 = vperm.slane %v306, %v350
        %vm352 = vcmask 523712
        %v353 = vsel %vm352, %v351, %v349
        %vm354 = vcmask 523264
        %v355 = vsel %vm354, %v353, 0
        %357 = vmatpush.msra.mxu0 0.0
        %358 = vmatpush.msra.mxu0 0.0
        %359 = vmatpush.msra.mxu0 0.0
        %360 = vmatpush.msra.mxu0 0.0
        %361 = vmatpush.msra.mxu0 0.0
        %362 = vmatpush.msra.mxu0 0.0
        %363 = vmatpush.msra.mxu0 0.0
        %364 = vmatpush.msra.mxu0 0.0
        %365 = vmatpush.msra.mxu0 %v314
        %366 = vmatpush.msra.mxu0 %v313
        %367 = vmatpush.msra.mxu0 %v312
        %368 = vmatpush.msra.mxu0 %v311
        %369 = vmatpush.msra.mxu0 %v310
        %370 = vmatpush.msra.mxu0 %v309
        %371 = vmatpush.msra.mxu0 %v308
        %372 = vmatpush.msra.mxu0 %v307
        %373 = vmatmul.f32.gmra.mxu0 %v355
        %v374 = vpop.f32.mrf.mxu0
        %v375 = vadd.f32 0.0, %v374
        %376 = vdwg.mxu0
        %s377 = sld [smem:[#allocation2]]
        %s378 = sld [smem:[#allocation2 + $0x1]]
        %v379 = vstv %s377
        %v380 = vmul.f32 %v379, %v375
        %vm381 = vcmask 122880
        %v382 = vsel %vm381, %v380, -inf
        %383 = vmax.xlane.f32.xlu0 %v382
        %v384 = vpop.xlane.xlu0 %383
        %v385 = vsub.f32 %v380, %v384
        %v386 = vmul.f32 %v385, 1.442695
        %v387 = vpow.pop %v386
        %v388 = vsel %vm381, %v387, 0.0
        %389 = vadd.xlane.f32.xlu0 %v388
        %v390 = vpop.xlane.xlu0 %389
        %v391 = vrcp.pop %v390
        %v392 = vmul.f32 %v390, %v391
        %v393 = vsub.f32 1.0, %v392
        %v394 = vmul.f32 %v391, %v393
        %v395 = vadd.f32 %v391, %v394
        %vm396 = vweird.f32 %v390
        %vm397 = vweird.f32 %v391
        %vm398 = vmor %vm396, %vm397
        %v399 = vsel %vm398, %v391, %v395
        %v400 = vand.u32 2147483647, %v390
        %vm401 = vcmp.eq.f32.partialorder %v400, 8.507059e+37
        %v402 = vand.u32 %v390, 2147483648
        %v403 = vor.u32 1.1754944e-38, %v402
        %v404 = vsel %vm401, %v403, %v399
        %v405 = vmul.f32 %v387, %v404
        %v406 = vmul.f32 %v375, %v405
        %v407 = vld [vmem:[%s3] sm:$0xff]
        %v408 = vld [vmem:[%s3 + $0x8] sm:$0xff]
        %vm409 = vcmask 130048
        %v411 = vsel %vm409, %v375, 0
        %413 = vmatpush.msra.mxu0 0.0
        %414 = vmatpush.msra.mxu0 0.0
        %415 = vmatpush.msra.mxu0 0.0
        %416 = vmatpush.msra.mxu0 0.0
        %417 = vmatpush.msra.mxu0 0.0
        %418 = vmatpush.msra.mxu0 0.0
        %419 = vmatpush.msra.mxu0 0.0
        %420 = vmatpush.msra.mxu0 0.0
        %421 = vmatpush.msra.mxu0 0.0
        %422 = vmatpush.msra.mxu0 0.0
        %423 = vmatpush.msra.mxu0 0.0
        %424 = vmatpush.msra.mxu0 0.0
        %425 = vmatpush.msra.mxu0 0.0
        %426 = vmatpush.msra.mxu0 0.0
        %427 = vmatpush.msra.mxu0 %v408
        %428 = vmatpush.msra.mxu0 %v407
        %429 = vmatmul.f32.gmra.mxu0 %v411
        %v430 = vpop.f32.mrf.mxu0
        %v431 = vadd.f32 0.0, %v430
        %432 = vdwg.mxu0
        %v433 = vadd.f32 %v406, %v431
        %v434 = vstv %s378
        %v435 = vmul.f32 %v434, %v433
        %v436 = vmax.f32 %v435, 0.0
        %v437 = vld [vmem:[%s4] sm:$0xff]
        %v438 = vld [vmem:[%s4 + $0x8] sm:$0xff]
        %v440 = vsel %vm409, %v436, 0
        %442 = vmatpush.msra.mxu0 0.0
        %443 = vmatpush.msra.mxu0 0.0
        %444 = vmatpush.msra.mxu0 0.0
        %445 = vmatpush.msra.mxu0 0.0
        %446 = vmatpush.msra.mxu0 0.0
        %447 = vmatpush.msra.mxu0 0.0
        %448 = vmatpush.msra.mxu0 0.0
        %449 = vmatpush.msra.mxu0 0.0
        %450 = vmatpush.msra.mxu0 0.0
        %451 = vmatpush.msra.mxu0 0.0
        %452 = vmatpush.msra.mxu0 0.0
        %453 = vmatpush.msra.mxu0 0.0
        %454 = vmatpush.msra.mxu0 0.0
        %455 = vmatpush.msra.mxu0 0.0
        %456 = vmatpush.msra.mxu0 %v438
        %457 = vmatpush.msra.mxu0 %v437
        %458 = vmatmul.f32.gmra.mxu0 %v440
        %v459 = vpop.f32.mrf.mxu0
        %v460 = vadd.f32 0.0, %v459
        %461 = vdwg.mxu0
        %v462 = vxor.u32 %v460, 2147483648
        %v463 = vmul.f32 %v462, 1.442695
        %v464 = vpow.pop %v463
        %v465 = vadd.f32 %v464, 1.0
        %v466 = vrcp.pop %v465
        %v467 = vmul.f32 %v465, %v466
        %v468 = vsub.f32 1.0, %v467
        %v469 = vmul.f32 %v466, %v468
        %v470 = vadd.f32 %v466, %v469
        %vm471 = vweird.f32 %v465
        %vm472 = vweird.f32 %v466
        %vm473 = vmor %vm471, %vm472
        %v474 = vsel %vm473, %v466, %v470
        %v475 = vand.u32 2147483647, %v465
        %vm476 = vcmp.eq.f32.partialorder %v475, 8.507059e+37
        %v477 = vand.u32 %v465, 2147483648
        %v478 = vor.u32 1.1754944e-38, %v477
        %v479 = vsel %vm476, %v478, %v474
        %v480 = vmul.f32 1.0, %v479
        %v481 = vperm.slane %v480, 0
        %v482 = vlaneseq
        %v483 = vshrl.u32 %v482, 7
        %485 = vset.pattern.permute.xlu0 %v483
        %486 = vperm.xlu0 %485, %v481
        %v487 = vpop.permute.xlu0 %486
        %v488 = vlaneseq
        %v489 = vshrl.u32 %v488, 7
        %v490 = vadd.s32 %v489, 8
        %491 = vset.pattern.permute.xlu0 %v490
        %492 = vperm.xlu0 %491, %v481
        %v493 = vpop.permute.xlu0 %492
        %v494 = vlaneseq
        %v495 = vshrl.u32 %v494, 7
        %v496 = vadd.s32 %v495, 16
        %497 = vset.pattern.permute.xlu0 %v496
        %498 = vperm.xlu0 %497, %v481
        %v499 = vpop.permute.xlu0 %498
        %v500 = vlaneseq
        %v501 = vshrl.u32 %v500, 7
        %v502 = vadd.s32 %v501, 24
        %503 = vset.pattern.permute.xlu0 %v502
        %504 = vperm.xlu0 %503, %v481
        %v505 = vpop.permute.xlu0 %504
        %v506 = vlaneseq
        %v507 = vshrl.u32 %v506, 7
        %v508 = vadd.s32 %v507, 32
        %509 = vset.pattern.permute.xlu0 %v508
        %510 = vperm.xlu0 %509, %v481
        %v511 = vpop.permute.xlu0 %510
        %v512 = vlaneseq
        %v513 = vshrl.u32 %v512, 7
        %v514 = vadd.s32 %v513, 40
        %515 = vset.pattern.permute.xlu0 %v514
        %516 = vperm.xlu0 %515, %v481
        %v517 = vpop.permute.xlu0 %516
        %v518 = vlaneseq
        %v519 = vshrl.u32 %v518, 7
        %v520 = vadd.s32 %v519, 48
        %521 = vset.pattern.permute.xlu0 %v520
        %522 = vperm.xlu0 %521, %v481
        %v523 = vpop.permute.xlu0 %522
        %v524 = vlaneseq
        %v525 = vshrl.u32 %v524, 7
        %v526 = vadd.s32 %v525, 56
        %527 = vset.pattern.permute.xlu0 %v526
        %528 = vperm.xlu0 %527, %v481
        %v529 = vpop.permute.xlu0 %528
        %v530 = vmul.f32 %v259, %v487
        %v531 = vmul.f32 %v260, %v487
        %v532 = vmul.f32 %v261, %v493
        %v533 = vmul.f32 %v262, %v493
        %v534 = vmul.f32 %v263, %v499
        %v535 = vmul.f32 %v264, %v499
        %v536 = vmul.f32 %v265, %v505
        %v537 = vmul.f32 %v266, %v505
        %v538 = vmul.f32 %v267, %v511
        %v539 = vmul.f32 %v268, %v511
        %v540 = vmul.f32 %v269, %v517
        %v541 = vmul.f32 %v270, %v517
        %v542 = vmul.f32 %v271, %v523
        %v543 = vmul.f32 %v272, %v523
        %v544 = vmul.f32 %v273, %v529
        %v545 = vmul.f32 %v274, %v529
        %546 = vst [vmem:[%s258] sm:$0xff] %v530
        %547 = vst [vmem:[%s258 + $0x8] sm:$0xff] %v531
        %548 = vst [vmem:[%s258 + $0x10] sm:$0xff] %v532
        %549 = vst [vmem:[%s258 + $0x18] sm:$0xff] %v533
        %550 = vst [vmem:[%s258 + $0x20] sm:$0xff] %v534
        %551 = vst [vmem:[%s258 + $0x28] sm:$0xff] %v535
        %552 = vst [vmem:[%s258 + $0x30] sm:$0xff] %v536
        %553 = vst [vmem:[%s258 + $0x38] sm:$0xff] %v537
        %554 = vst [vmem:[%s258 + $0x40] sm:$0xff] %v538
        %555 = vst [vmem:[%s258 + $0x48] sm:$0xff] %v539
        %556 = vst [vmem:[%s258 + $0x50] sm:$0xff] %v540
        %557 = vst [vmem:[%s258 + $0x58] sm:$0xff] %v541
        %558 = vst [vmem:[%s258 + $0x60] sm:$0xff] %v542
        %559 = vst [vmem:[%s258 + $0x68] sm:$0xff] %v543
        %560 = vst [vmem:[%s258 + $0x70] sm:$0xff] %v544
        %561 = vst [vmem:[%s258 + $0x78] sm:$0xff] %v545
        %s562 = sand.u32 %s141, 1
        %s563 = scalar_lea.sflag [#allocation4], %s562
        %s564 = sand.u32 %s141, 1
        %s565 = smul.addr %s564, 128
        %s566 = scalar_lea.vmem [#allocation7], %s565
        // Predicated region
        $region49: #{tpu_custom_call.1} parent=39 // pred_check
          %p567 = pneg %p151
        $region50: #{tpu_custom_call.1} parent=39 // pred_check_branch
          %569 = sbr.rel (%p567) target = $region52
        $region51: #{tpu_custom_call.1} parent=39 // pred_region
          %571 = vsyncadd %s563, 0
          %s572 = smul.addr %s23, 16
          %s573 = smul.addr %s572, 8
          %s574 = scalar_lea.hbm %s5, %s573
          %s575 = sshll.u32 %s566, 4
          %s576 = int_to_ptr.vmem [resolvable:$true] %s575
          %s577 = sshll.u32 %s574, 4
          %s578 = int_to_ptr.hbm [resolvable:$true] %s577
          %583 = dma.vmem_to_hbm [thread:$0]  %s576, 2048, %s578, %s563, 256, 256, 16
        $region52: #{tpu_custom_call.1} parent=39 // pred_fallthru
          _
      $region40: #{tpu_custom_call.1} parent=5 // pred_fallthru
        _
      %p584 = scmp.le.s32.totalorder 2, %s18
      // Predicated region
      $region53: #{tpu_custom_call.1} parent=5 // pred_check
        %p585 = pneg %p584
      $region54: #{tpu_custom_call.1} parent=5 // pred_check_branch
        %587 = sbr.rel (%p585) target = $region56
      $region55: #{tpu_custom_call.1} parent=5 // pred_region
        %s588 = ssub.s32 %s18, 2
        // Predicated region
        $region57: #{tpu_custom_call.1} parent=55 // pred_check
          %p589 = pneg %p157
        $region58: #{tpu_custom_call.1} parent=55 // pred_check_branch
          %591 = sbr.rel (%p589) target = $region60
        $region59: #{tpu_custom_call.1} parent=55 // pred_region
          %s592 = sand.u32 %s142, 1
          %s593 = scalar_lea.sflag [#allocation4], %s592
          %s594 = sand.u32 %s142, 1
          %s595 = smul.addr %s594, 128
          %s596 = scalar_lea.vmem [#allocation7], %s595
          %598 = dma.done %s593, 2048
        $region60: #{tpu_custom_call.1} parent=55 // pred_fallthru
          _
      $region56: #{tpu_custom_call.1} parent=5 // pred_fallthru
        _
    $region6: #{tpu_custom_call.1} parent=1 // loop_footer
      %s22 = sadd.s32 1, %s18
    $region7: #{tpu_custom_call.1} parent=1 // loop_footer_branch
      %17 = sbr.rel target = $region3
    $region8: #{tpu_custom_call.1} parent=1 // loop_exit
      _
    %599 = vsyncpa [#allocation3], 1
    %s600 = scalar_lea.sflag [#allocation3], 1
    %601 = vsyncpa %s600, 1
    %602 = vsyncpa [#allocation4], 1
    %s603 = scalar_lea.sflag [#allocation4], 1
    %604 = vsyncpa %s603, 1
    %605 = vsyncpa [#allocation5], 1
    %s606 = scalar_lea.sflag [#allocation5], 1
    %607 = vsyncpa %s606, 1

</llo_original>
